<compile_context>
chip_gen: v6e
topology: v6e:2x2x1
jax: 0.10.0
libtpu: 0.0.40
codegen_flags: <defaults>
</compile_context>

<pallas_src>
import jax
import jax.numpy as jnp
from jax.experimental import pallas as pl
from jax.experimental.pallas import tpu as pltpu

LEAKY_SLOPE = 0.01   # PyTorch nn.LeakyReLU default
BN_EPS = 1e-5        # PyTorch nn.BatchNorm1d default
OUT_PAD = 128        # lane-dense padded head width (real outputs = 10)


def _leaky_relu(h):
    return jnp.where(h >= 0, h, LEAKY_SLOPE * h)


def _round_up(n, m):
    return ((n + m - 1) // m) * m


# ---------------------------------------------------------------------------
# Kernel: 4 matmuls + bias + LeakyReLU (BN already folded into the weights).
# x tile is (TB, 784) bf16; weights bf16; biases f32; accumulation f32.
# ---------------------------------------------------------------------------
def mnistnet_kernel(x_ref,
                    w1_ref, b1_ref,
                    w2_ref, b2_ref,
                    w3_ref, b3_ref,
                    w4_ref, b4_ref,
                    o_ref):
    x = x_ref[...]                                                     # (TB, 784) bf16
    h = jnp.dot(x, w1_ref[...], preferred_element_type=jnp.float32) + b1_ref[...]
    h = _leaky_relu(h)                                                 # f32 elementwise
    h = jnp.dot(h.astype(jnp.bfloat16), w2_ref[...],
                preferred_element_type=jnp.float32) + b2_ref[...]
    h = _leaky_relu(h)
    h = jnp.dot(h.astype(jnp.bfloat16), w3_ref[...],
                preferred_element_type=jnp.float32) + b3_ref[...]
    h = _leaky_relu(h)
    out = jnp.dot(h.astype(jnp.bfloat16), w4_ref[...],
                  preferred_element_type=jnp.float32) + b4_ref[...]    # (TB, 128)
    o_ref[...] = out


# ---------------------------------------------------------------------------
# Host-side BN folding (eval mode): BN_i(LeakyReLU(.)) folds exactly into the
# next Linear layer:  W' = scale[:,None] * W,  b' = shift @ W + b,
# where scale = g * rsqrt(var+eps), shift = beta - mean*scale.
# The final BN3 folds into the output head, which is also zero-padded to 128
# output columns for lane-dense stores.
# ---------------------------------------------------------------------------
def fold_params(params):
    def bn_affine(g, beta, m, v):
        scale = g * jax.lax.rsqrt(v + BN_EPS)   # (1, dim)
        shift = beta - m * scale                # (1, dim)
        return scale, shift

    s1, t1 = bn_affine(params["g1"], params["beta1"], params["rm1"], params["rv1"])
    s2, t2 = bn_affine(params["g2"], params["beta2"], params["rm2"], params["rv2"])
    s3, t3 = bn_affine(params["g3"], params["beta3"], params["rm3"], params["rv3"])

    w1, b1 = params["w1"], params["b1"]
    w2 = params["w2"] * s1.reshape(-1, 1)
    b2 = t1 @ params["w2"] + params["b2"]
    w3 = params["w3"] * s2.reshape(-1, 1)
    b3 = t2 @ params["w3"] + params["b3"]
    w4 = params["w4"] * s3.reshape(-1, 1)
    b4 = t3 @ params["w4"] + params["b4"]

    # lane-dense head: pad 10 -> OUT_PAD output columns with zeros
    w4p = jnp.zeros((w4.shape[0], OUT_PAD), jnp.float32).at[:, :10].set(w4)
    b4p = jnp.zeros((1, OUT_PAD), jnp.float32).at[:, :10].set(b4)
    return {"w1": w1, "b1": b1, "w2": w2, "b2": b2,
            "w3": w3, "b3": b3, "w4": w4p, "b4": b4p}


# ---------------------------------------------------------------------------
# Wrapper: pads batch to a multiple of the tile, builds the batch grid.
# ---------------------------------------------------------------------------
def mnistnet_forward(x, params, *, tb=1024):
    B = x.shape[0]
    fp = fold_params(params)

    # bf16 min sublane tile is 16 -> keep TB a multiple of 16.
    TB = min(_round_up(tb, 16), _round_up(B, 16))
    Bp = _round_up(B, TB)

    x_bf = x.astype(jnp.bfloat16)
    if Bp != B:
        x_bf = jnp.pad(x_bf, ((0, Bp - B), (0, 0)))

    # Weights in bf16 (feeds MXU bf16 path), biases stay f32.
    w1 = fp["w1"].astype(jnp.bfloat16); b1 = fp["b1"].astype(jnp.float32)
    w2 = fp["w2"].astype(jnp.bfloat16); b2 = fp["b2"].astype(jnp.float32)
    w3 = fp["w3"].astype(jnp.bfloat16); b3 = fp["b3"].astype(jnp.float32)
    w4 = fp["w4"].astype(jnp.bfloat16); b4 = fp["b4"].astype(jnp.float32)

    grid = (pl.cdiv(Bp, TB),)

    def const_spec(arr):
        # Full-array block, same block index every grid step -> resident in VMEM.
        ndim = arr.ndim
        return pl.BlockSpec(arr.shape, lambda i, _n=ndim: (0,) * _n)

    in_specs = [
        pl.BlockSpec((TB, 784), lambda i: (i, 0)),   # x tile, pipelined over batch
        const_spec(w1), const_spec(b1),
        const_spec(w2), const_spec(b2),
        const_spec(w3), const_spec(b3),
        const_spec(w4), const_spec(b4),
    ]
    out_specs = pl.BlockSpec((TB, OUT_PAD), lambda i: (i, 0))

    flops_per_row = 2 * (784 * 64 + 64 * 32 + 32 * 32 + 32 * OUT_PAD)
    weight_bytes = (784 * 64 + 64 * 32 + 32 * 32 + 32 * OUT_PAD) * 2 \
                   + (64 + 32 + 32 + OUT_PAD) * 4
    cost = pl.CostEstimate(
        flops=int(Bp * flops_per_row),
        transcendentals=0,
        bytes_accessed=int(Bp * 784 * 2 + Bp * OUT_PAD * 4 + weight_bytes),
    )

    out = pl.pallas_call(
        mnistnet_kernel,
        out_shape=jax.ShapeDtypeStruct((Bp, OUT_PAD), jnp.float32),
        grid=grid,
        in_specs=in_specs,
        out_specs=out_specs,
        compiler_params=pltpu.CompilerParams(
            dimension_semantics=("parallel",),
        ),
        cost_estimate=cost,
    )(x_bf, w1, b1, w2, b2, w3, b3, w4, b4)

    return out[:B, :10]


# ---------------------------------------------------------------------------
# Deterministic parameter init (same shapes/layout as the PyTorch module;
# Linear weights stored transposed as (in, out), BN params as (1, dim) rows).
# ---------------------------------------------------------------------------
def init_params(key):
    dims = [(784, 64), (64, 32), (32, 32), (32, 10)]
    params = {}
    keys = jax.random.split(key, 16)
    ki = 0
    for idx, (din, dout) in enumerate(dims, start=1):
        bound = 1.0 / (din ** 0.5)
        params[f"w{idx}"] = jax.random.uniform(
            keys[ki], (din, dout), jnp.float32, -bound, bound); ki += 1
        params[f"b{idx}"] = jax.random.uniform(
            keys[ki], (1, dout), jnp.float32, -bound, bound); ki += 1
    for idx, dim in enumerate([64, 32, 32], start=1):
        params[f"g{idx}"] = 1.0 + 0.1 * jax.random.normal(
            keys[ki], (1, dim), jnp.float32); ki += 1
        params[f"beta{idx}"] = 0.1 * jax.random.normal(
            keys[ki], (1, dim), jnp.float32); ki += 1
        params[f"rm{idx}"] = 0.05 * jnp.arange(dim, dtype=jnp.float32).reshape(1, dim) / dim
        params[f"rv{idx}"] = 0.5 + jnp.linspace(0.0, 1.0, dim, dtype=jnp.float32).reshape(1, dim)
    return params


# ---------------------------------------------------------------------------
# Pure-JAX references for correctness checks.
# ---------------------------------------------------------------------------
def reference_forward(x, p):
    """Unfolded f32 reference matching the PyTorch eval-mode forward."""
    def bn(h, g, b, m, v):
        return (h - m) * jax.lax.rsqrt(v + BN_EPS) * g + b
    h = x @ p["w1"] + p["b1"]
    h = bn(_leaky_relu(h), p["g1"], p["beta1"], p["rm1"], p["rv1"])
    h = h @ p["w2"] + p["b2"]
    h = bn(_leaky_relu(h), p["g2"], p["beta2"], p["rm2"], p["rv2"])
    h = h @ p["w3"] + p["b3"]
    h = bn(_leaky_relu(h), p["g3"], p["beta3"], p["rm3"], p["rv3"])
    return h @ p["w4"] + p["b4"]


def reference_forward_folded(x, fp):
    """Folded f32 reference (checks the BN-folding algebra)."""
    h = _leaky_relu(x @ fp["w1"] + fp["b1"])
    h = _leaky_relu(h @ fp["w2"] + fp["b2"])
    h = _leaky_relu(h @ fp["w3"] + fp["b3"])
    return (h @ fp["w4"] + fp["b4"])[:, :10]


def reference_forward_folded_bf16(x, fp):
    """Folded reference with the same bf16 quantization the kernel uses
    (bf16 inputs/weights, f32 accumulation + f32 biases/elementwise)."""
    def mm(a, w):
        return jnp.dot(a.astype(jnp.bfloat16), w.astype(jnp.bfloat16),
                       preferred_element_type=jnp.float32)
    h = _leaky_relu(mm(x, fp["w1"]) + fp["b1"])
    h = _leaky_relu(mm(h, fp["w2"]) + fp["b2"])
    h = _leaky_relu(mm(h, fp["w3"]) + fp["b3"])
    return (mm(h, fp["w4"]) + fp["b4"])[:, :10]


if __name__ == "__main__":
    key = jax.random.PRNGKey(0)
    k_x, k_p = jax.random.split(key)
    B = 64
    x = jax.random.normal(k_x, (B, 784), jnp.float32)
    params = init_params(k_p)
    fp = fold_params(params)

    # Sanity: host-side BN folding matches the original unfolded math (f32).
    ref = reference_forward(x, params)
    ref_folded = reference_forward_folded(x, fp)
    assert jnp.allclose(ref_folded, ref, atol=1e-3, rtol=1e-3), "BN folding mismatch"

    out = mnistnet_forward(x, params)
    out = jax.block_until_ready(out)
    assert out.shape == (B, 10)

    # Tight check vs a reference using identical bf16 quantization (isolates
    # kernel correctness from quantization error).
    ref_bf16 = reference_forward_folded_bf16(x, fp)
    assert jnp.allclose(out, ref_bf16, atol=2e-2, rtol=2e-2), \
        "mismatch vs bf16-quantized JAX reference"

    # Loose check vs the full f32 eval-mode reference (covers bf16 rounding).
    assert jnp.allclose(out, ref, atol=1e-1, rtol=1e-1), \
        "mismatch vs f32 JAX reference"

    print("KERNEL_OK")
</pallas_src>

<mosaic_0001>
module attributes {stable_mosaic.version = 11 : i64} {
  func.func @mnistnet_kernel(%arg0: i32, %arg1: memref<64x784xbf16, #tpu.memory_space<vmem>>, %arg2: memref<784x64xbf16, #tpu.memory_space<vmem>>, %arg3: memref<1x64xf32, #tpu.memory_space<vmem>>, %arg4: memref<64x32xbf16, #tpu.memory_space<vmem>>, %arg5: memref<1x32xf32, #tpu.memory_space<vmem>>, %arg6: memref<32x32xbf16, #tpu.memory_space<vmem>>, %arg7: memref<1x32xf32, #tpu.memory_space<vmem>>, %arg8: memref<32x128xbf16, #tpu.memory_space<vmem>>, %arg9: memref<1x128xf32, #tpu.memory_space<vmem>>, %arg10: memref<64x128xf32, #tpu.memory_space<vmem>>) attributes {dimension_semantics = [#tpu.dimension_semantics<parallel>], iteration_bounds = array<i64: 1>, scalar_prefetch = 0 : i64, scratch_operands = 0 : i64, tpu.core_type = #tpu.core_type<tc>, window_params = [{transform_indices = @transform_0, window_bounds = array<i64: 64, 784>}, {pipeline_mode = #tpu.pipeline_mode<synchronous>, transform_indices = @transform_1, window_bounds = array<i64: 784, 64>}, {pipeline_mode = #tpu.pipeline_mode<synchronous>, transform_indices = @transform_2, window_bounds = array<i64: 1, 64>}, {pipeline_mode = #tpu.pipeline_mode<synchronous>, transform_indices = @transform_3, window_bounds = array<i64: 64, 32>}, {pipeline_mode = #tpu.pipeline_mode<synchronous>, transform_indices = @transform_4, window_bounds = array<i64: 1, 32>}, {pipeline_mode = #tpu.pipeline_mode<synchronous>, transform_indices = @transform_5, window_bounds = array<i64: 32, 32>}, {pipeline_mode = #tpu.pipeline_mode<synchronous>, transform_indices = @transform_6, window_bounds = array<i64: 1, 32>}, {pipeline_mode = #tpu.pipeline_mode<synchronous>, transform_indices = @transform_7, window_bounds = array<i64: 32, 128>}, {pipeline_mode = #tpu.pipeline_mode<synchronous>, transform_indices = @transform_8, window_bounds = array<i64: 1, 128>}, {transform_indices = @transform_9, window_bounds = array<i64: 64, 128>}]} {
    %c0 = arith.constant 0 : index
    %c0_0 = arith.constant 0 : index
    %0 = vector.load %arg1[%c0, %c0_0] : memref<64x784xbf16, #tpu.memory_space<vmem>>, vector<64x784xbf16>
    %c0_1 = arith.constant 0 : index
    %c0_2 = arith.constant 0 : index
    %1 = vector.load %arg2[%c0_1, %c0_2] : memref<784x64xbf16, #tpu.memory_space<vmem>>, vector<784x64xbf16>
    %cst = arith.constant dense<0.000000e+00> : vector<64x64xf32>
    %2 = tpu.matmul %0, %1, %cst {dimension_numbers = #tpu.dot_dimension_numbers<[1], [0], [0], [1], [0, 0, 1, 1], [], []>} : vector<64x784xbf16>, vector<784x64xbf16>, vector<64x64xf32> -> vector<64x64xf32>
    %c0_3 = arith.constant 0 : index
    %c0_4 = arith.constant 0 : index
    %3 = vector.load %arg3[%c0_3, %c0_4] : memref<1x64xf32, #tpu.memory_space<vmem>>, vector<1x64xf32>
    %4 = vector.broadcast %3 : vector<1x64xf32> to vector<64x64xf32>
    %5 = arith.addf %2, %4 : vector<64x64xf32>
    %cst_5 = arith.constant 0.000000e+00 : f32
    %6 = vector.broadcast %cst_5 : f32 to vector<64x64xf32>
    %7 = arith.cmpf oge, %5, %6 : vector<64x64xf32>
    %cst_6 = arith.constant 0.00999999977 : f32
    %8 = vector.broadcast %cst_6 : f32 to vector<64x64xf32>
    %9 = arith.mulf %8, %5 : vector<64x64xf32>
    %10 = arith.select %7, %5, %9 : vector<64x64xi1>, vector<64x64xf32>
    %11 = arith.truncf %10 : vector<64x64xf32> to vector<64x64xbf16>
    %c0_7 = arith.constant 0 : index
    %c0_8 = arith.constant 0 : index
    %12 = vector.load %arg4[%c0_7, %c0_8] : memref<64x32xbf16, #tpu.memory_space<vmem>>, vector<64x32xbf16>
    %cst_9 = arith.constant dense<0.000000e+00> : vector<64x32xf32>
    %13 = tpu.matmul %11, %12, %cst_9 {dimension_numbers = #tpu.dot_dimension_numbers<[1], [0], [0], [1], [0, 0, 1, 1], [], []>} : vector<64x64xbf16>, vector<64x32xbf16>, vector<64x32xf32> -> vector<64x32xf32>
    %c0_10 = arith.constant 0 : index
    %c0_11 = arith.constant 0 : index
    %14 = vector.load %arg5[%c0_10, %c0_11] : memref<1x32xf32, #tpu.memory_space<vmem>>, vector<1x32xf32>
    %15 = vector.broadcast %14 : vector<1x32xf32> to vector<64x32xf32>
    %16 = arith.addf %13, %15 : vector<64x32xf32>
    %cst_12 = arith.constant 0.000000e+00 : f32
    %17 = vector.broadcast %cst_12 : f32 to vector<64x32xf32>
    %18 = arith.cmpf oge, %16, %17 : vector<64x32xf32>
    %cst_13 = arith.constant 0.00999999977 : f32
    %19 = vector.broadcast %cst_13 : f32 to vector<64x32xf32>
    %20 = arith.mulf %19, %16 : vector<64x32xf32>
    %21 = arith.select %18, %16, %20 : vector<64x32xi1>, vector<64x32xf32>
    %22 = arith.truncf %21 : vector<64x32xf32> to vector<64x32xbf16>
    %c0_14 = arith.constant 0 : index
    %c0_15 = arith.constant 0 : index
    %23 = vector.load %arg6[%c0_14, %c0_15] : memref<32x32xbf16, #tpu.memory_space<vmem>>, vector<32x32xbf16>
    %cst_16 = arith.constant dense<0.000000e+00> : vector<64x32xf32>
    %24 = tpu.matmul %22, %23, %cst_16 {dimension_numbers = #tpu.dot_dimension_numbers<[1], [0], [0], [1], [0, 0, 1, 1], [], []>} : vector<64x32xbf16>, vector<32x32xbf16>, vector<64x32xf32> -> vector<64x32xf32>
    %c0_17 = arith.constant 0 : index
    %c0_18 = arith.constant 0 : index
    %25 = vector.load %arg7[%c0_17, %c0_18] : memref<1x32xf32, #tpu.memory_space<vmem>>, vector<1x32xf32>
    %26 = vector.broadcast %25 : vector<1x32xf32> to vector<64x32xf32>
    %27 = arith.addf %24, %26 : vector<64x32xf32>
    %cst_19 = arith.constant 0.000000e+00 : f32
    %28 = vector.broadcast %cst_19 : f32 to vector<64x32xf32>
    %29 = arith.cmpf oge, %27, %28 : vector<64x32xf32>
    %cst_20 = arith.constant 0.00999999977 : f32
    %30 = vector.broadcast %cst_20 : f32 to vector<64x32xf32>
    %31 = arith.mulf %30, %27 : vector<64x32xf32>
    %32 = arith.select %29, %27, %31 : vector<64x32xi1>, vector<64x32xf32>
    %33 = arith.truncf %32 : vector<64x32xf32> to vector<64x32xbf16>
    %c0_21 = arith.constant 0 : index
    %c0_22 = arith.constant 0 : index
    %34 = vector.load %arg8[%c0_21, %c0_22] : memref<32x128xbf16, #tpu.memory_space<vmem>>, vector<32x128xbf16>
    %cst_23 = arith.constant dense<0.000000e+00> : vector<64x128xf32>
    %35 = tpu.matmul %33, %34, %cst_23 {dimension_numbers = #tpu.dot_dimension_numbers<[1], [0], [0], [1], [0, 0, 1, 1], [], []>} : vector<64x32xbf16>, vector<32x128xbf16>, vector<64x128xf32> -> vector<64x128xf32>
    %c0_24 = arith.constant 0 : index
    %c0_25 = arith.constant 0 : index
    %36 = vector.load %arg9[%c0_24, %c0_25] : memref<1x128xf32, #tpu.memory_space<vmem>>, vector<1x128xf32>
    %37 = vector.broadcast %36 : vector<1x128xf32> to vector<64x128xf32>
    %38 = arith.addf %35, %37 : vector<64x128xf32>
    %c0_26 = arith.constant 0 : index
    %c0_27 = arith.constant 0 : index
    %39 = vector.load %arg10[%c0_26, %c0_27] : memref<64x128xf32, #tpu.memory_space<vmem>>, vector<64x128xf32>
    tpu.vector_store %arg10[%c0_26, %c0_27], %38 {strides = array<i32>} : memref<64x128xf32, #tpu.memory_space<vmem>>, vector<64x128xf32>,
    return
  }
  func.func @transform_0(%arg0: i32) -> (i32, i32) {
    %c0_i32 = arith.constant 0 : i32
    %c0_i32_0 = arith.constant 0 : i32
    return %arg0, %c0_i32 : i32, i32
  }
  func.func @transform_1(%arg0: i32) -> (i32, i32) {
    %c0_i32 = arith.constant 0 : i32
    %c0_i32_0 = arith.constant 0 : i32
    %c0_i32_1 = arith.constant 0 : i32
    return %c0_i32, %c0_i32_0 : i32, i32
  }
  func.func @transform_2(%arg0: i32) -> (i32, i32) {
    %c0_i32 = arith.constant 0 : i32
    %c0_i32_0 = arith.constant 0 : i32
    %c0_i32_1 = arith.constant 0 : i32
    return %c0_i32, %c0_i32_0 : i32, i32
  }
  func.func @transform_3(%arg0: i32) -> (i32, i32) {
    %c0_i32 = arith.constant 0 : i32
    %c0_i32_0 = arith.constant 0 : i32
    %c0_i32_1 = arith.constant 0 : i32
    return %c0_i32, %c0_i32_0 : i32, i32
  }
  func.func @transform_4(%arg0: i32) -> (i32, i32) {
    %c0_i32 = arith.constant 0 : i32
    %c0_i32_0 = arith.constant 0 : i32
    %c0_i32_1 = arith.constant 0 : i32
    return %c0_i32, %c0_i32_0 : i32, i32
  }
  func.func @transform_5(%arg0: i32) -> (i32, i32) {
    %c0_i32 = arith.constant 0 : i32
    %c0_i32_0 = arith.constant 0 : i32
    %c0_i32_1 = arith.constant 0 : i32
    return %c0_i32, %c0_i32_0 : i32, i32
  }
  func.func @transform_6(%arg0: i32) -> (i32, i32) {
    %c0_i32 = arith.constant 0 : i32
    %c0_i32_0 = arith.constant 0 : i32
    %c0_i32_1 = arith.constant 0 : i32
    return %c0_i32, %c0_i32_0 : i32, i32
  }
  func.func @transform_7(%arg0: i32) -> (i32, i32) {
    %c0_i32 = arith.constant 0 : i32
    %c0_i32_0 = arith.constant 0 : i32
    %c0_i32_1 = arith.constant 0 : i32
    return %c0_i32, %c0_i32_0 : i32, i32
  }
  func.func @transform_8(%arg0: i32) -> (i32, i32) {
    %c0_i32 = arith.constant 0 : i32
    %c0_i32_0 = arith.constant 0 : i32
    %c0_i32_1 = arith.constant 0 : i32
    return %c0_i32, %c0_i32_0 : i32, i32
  }
  func.func @transform_9(%arg0: i32) -> (i32, i32) {
    %c0_i32 = arith.constant 0 : i32
    %c0_i32_0 = arith.constant 0 : i32
    return %arg0, %c0_i32 : i32, i32
  }
}

</mosaic_0001>

<llo_original>
// kernel: tpu_custom_call.1
$region0: #{tpu_custom_call.1}
  #allocation0 [shape = 'u32[]', space=smem, size = 0x4, offset = 0x4, fixed_abs, tag = 'smem constant byte address 0x4 - core index']
  #allocation1 [shape = 'u32[144,128]{1,0:T(1,128)}', space=vmem, size = 0x12000, scoped, tag = 'internal scratch']
  %s0 = inlined_call_operand.vmem [shape: bf16[64,784], index: 0, kind: input, shape index: {}]
  %s1 = inlined_call_operand.vmem [shape: bf16[784,64], index: 1, kind: input, shape index: {}]
  %s2 = inlined_call_operand.vmem [shape: f32[1,64], index: 2, kind: input, shape index: {}]
  %s3 = inlined_call_operand.vmem [shape: bf16[64,32], index: 3, kind: input, shape index: {}]
  %s4 = inlined_call_operand.vmem [shape: f32[1,32], index: 4, kind: input, shape index: {}]
  %s5 = inlined_call_operand.vmem [shape: bf16[32,32], index: 5, kind: input, shape index: {}]
  %s6 = inlined_call_operand.vmem [shape: f32[1,32], index: 6, kind: input, shape index: {}]
  %s7 = inlined_call_operand.vmem [shape: bf16[32,128], index: 7, kind: input, shape index: {}]
  %s8 = inlined_call_operand.vmem [shape: f32[1,128], index: 8, kind: input, shape index: {}]
  %s9 = inlined_call_operand.hbm [shape: f32[64,128], index: 9, kind: output, shape index: {}]
  %s10 = sld [smem:[#allocation0]]
  $region46: #{tpu_custom_call.1} parent=0
    _
  %s12 = ssub.s32 1, %s10
  %s13 = scalar_select 0, %s12, %s10
  $region1: #{tpu_custom_call.1} parent=0
    #allocation2 [shape = 'u8[32768]{0}', space=vmem, size = 0x8000, scoped, tag = 'output window, operand 0, single buffered']
    #allocation3 [shape = 's32[1]{0}', space=sflag, size = 0x4, scoped, tag = 'scoped memory for tpu_custom_call.1']
    %14 = vsyncpa [#allocation3], 0
    // Predicated region
    $region2: #{tpu_custom_call.1} parent=1 // pred_check
      _
    $region3: #{tpu_custom_call.1} parent=1 // pred_check_branch
      %16 = sbr.rel (0) target = $region5
    $region4: #{tpu_custom_call.1} parent=1 // pred_region
      _
    $region5: #{tpu_custom_call.1} parent=1 // pred_fallthru
      _
    // Predicated region
    $region6: #{tpu_custom_call.1} parent=1 // pred_check
      _
    $region7: #{tpu_custom_call.1} parent=1 // pred_check_branch
      %18 = sbr.rel (0) target = $region9
    $region8: #{tpu_custom_call.1} parent=1 // pred_region
      _
    $region9: #{tpu_custom_call.1} parent=1 // pred_fallthru
      _
    // Predicated region
    $region10: #{tpu_custom_call.1} parent=1 // pred_check
      _
    $region11: #{tpu_custom_call.1} parent=1 // pred_check_branch
      %20 = sbr.rel (0) target = $region13
    $region12: #{tpu_custom_call.1} parent=1 // pred_region
      _
    $region13: #{tpu_custom_call.1} parent=1 // pred_fallthru
      _
    // Predicated region
    $region14: #{tpu_custom_call.1} parent=1 // pred_check
      _
    $region15: #{tpu_custom_call.1} parent=1 // pred_check_branch
      %22 = sbr.rel (0) target = $region17
    $region16: #{tpu_custom_call.1} parent=1 // pred_region
      _
    $region17: #{tpu_custom_call.1} parent=1 // pred_fallthru
      _
    // Predicated region
    $region18: #{tpu_custom_call.1} parent=1 // pred_check
      _
    $region19: #{tpu_custom_call.1} parent=1 // pred_check_branch
      %24 = sbr.rel (0) target = $region21
    $region20: #{tpu_custom_call.1} parent=1 // pred_region
      _
    $region21: #{tpu_custom_call.1} parent=1 // pred_fallthru
      _
    // Predicated region
    $region22: #{tpu_custom_call.1} parent=1 // pred_check
      _
    $region23: #{tpu_custom_call.1} parent=1 // pred_check_branch
      %26 = sbr.rel (0) target = $region25
    $region24: #{tpu_custom_call.1} parent=1 // pred_region
      _
    $region25: #{tpu_custom_call.1} parent=1 // pred_fallthru
      _
    // Predicated region
    $region26: #{tpu_custom_call.1} parent=1 // pred_check
      _
    $region27: #{tpu_custom_call.1} parent=1 // pred_check_branch
      %28 = sbr.rel (0) target = $region29
    $region28: #{tpu_custom_call.1} parent=1 // pred_region
      _
    $region29: #{tpu_custom_call.1} parent=1 // pred_fallthru
      _
    // Predicated region
    $region30: #{tpu_custom_call.1} parent=1 // pred_check
      _
    $region31: #{tpu_custom_call.1} parent=1 // pred_check_branch
      %30 = sbr.rel (0) target = $region33
    $region32: #{tpu_custom_call.1} parent=1 // pred_region
      _
    $region33: #{tpu_custom_call.1} parent=1 // pred_fallthru
      _
    // Predicated region
    $region34: #{tpu_custom_call.1} parent=1 // pred_check
      _
    $region35: #{tpu_custom_call.1} parent=1 // pred_check_branch
      %32 = sbr.rel (0) target = $region37
    $region36: #{tpu_custom_call.1} parent=1 // pred_region
      _
    $region37: #{tpu_custom_call.1} parent=1 // pred_fallthru
      _
    %v34 = vld [vmem:[%s0] sm:$0xff]
    %v35 = vld [vmem:[%s0 + $0x8] sm:$0xff]
    %v36 = vld [vmem:[%s0 + $0x10] sm:$0xff]
    %v37 = vld [vmem:[%s0 + $0x18] sm:$0xf]
    %v38 = vld [vmem:[%s0 + $0x1c] sm:$0xff]
    %v39 = vld [vmem:[%s0 + $0x24] sm:$0xff]
    %v40 = vld [vmem:[%s0 + $0x2c] sm:$0xff]
    %v41 = vld [vmem:[%s0 + $0x34] sm:$0xf]
    %v42 = vld [vmem:[%s0 + $0x38] sm:$0xff]
    %v43 = vld [vmem:[%s0 + $0x40] sm:$0xff]
    %v44 = vld [vmem:[%s0 + $0x48] sm:$0xff]
    %v45 = vld [vmem:[%s0 + $0x50] sm:$0xf]
    %v46 = vld [vmem:[%s0 + $0x54] sm:$0xff]
    %v47 = vld [vmem:[%s0 + $0x5c] sm:$0xff]
    %v48 = vld [vmem:[%s0 + $0x64] sm:$0xff]
    %v49 = vld [vmem:[%s0 + $0x6c] sm:$0xf]
    %v50 = vld [vmem:[%s0 + $0x70] sm:$0xff]
    %v51 = vld [vmem:[%s0 + $0x78] sm:$0xff]
    %v52 = vld [vmem:[%s0 + $0x80] sm:$0xff]
    %v53 = vld [vmem:[%s0 + $0x88] sm:$0xf]
    %v54 = vld [vmem:[%s0 + $0x8c] sm:$0xff]
    %v55 = vld [vmem:[%s0 + $0x94] sm:$0xff]
    %v56 = vld [vmem:[%s0 + $0x9c] sm:$0xff]
    %v57 = vld [vmem:[%s0 + $0xa4] sm:$0xf]
    %v58 = vld [vmem:[%s0 + $0xa8] sm:$0xff]
    %v59 = vld [vmem:[%s0 + $0xb0] sm:$0xff]
    %v60 = vld [vmem:[%s0 + $0xb8] sm:$0xff]
    %v61 = vld [vmem:[%s0 + $0xc0] sm:$0xf]
    %v62 = vld [vmem:[%s0 + $0xc4] sm:$0xff]
    %v63 = vld [vmem:[%s0 + $0xcc] sm:$0xff]
    %v64 = vld [vmem:[%s0 + $0xd4] sm:$0xff]
    %v65 = vld [vmem:[%s0 + $0xdc] sm:$0xf]
    %v66 = vld [vmem:[%s1] sm:$0xf]
    %v67 = vld [vmem:[%s1 + $0x4] sm:$0xf]
    %v68 = vld [vmem:[%s1 + $0x8] sm:$0xf]
    %v69 = vld [vmem:[%s1 + $0xc] sm:$0xf]
    %v70 = vld [vmem:[%s1 + $0x10] sm:$0xf]
    %v71 = vld [vmem:[%s1 + $0x14] sm:$0xf]
    %v72 = vld [vmem:[%s1 + $0x18] sm:$0xf]
    %v73 = vld [vmem:[%s1 + $0x1c] sm:$0xf]
    %v74 = vld [vmem:[%s1 + $0x20] sm:$0xf]
    %v75 = vld [vmem:[%s1 + $0x24] sm:$0xf]
    %v76 = vld [vmem:[%s1 + $0x28] sm:$0xf]
    %v77 = vld [vmem:[%s1 + $0x2c] sm:$0xf]
    %v78 = vld [vmem:[%s1 + $0x30] sm:$0xf]
    %v79 = vld [vmem:[%s1 + $0x34] sm:$0xf]
    %v80 = vld [vmem:[%s1 + $0x38] sm:$0xf]
    %v81 = vld [vmem:[%s1 + $0x3c] sm:$0xf]
    %v82 = vld [vmem:[%s1 + $0x40] sm:$0xf]
    %v83 = vld [vmem:[%s1 + $0x44] sm:$0xf]
    %v84 = vld [vmem:[%s1 + $0x48] sm:$0xf]
    %v85 = vld [vmem:[%s1 + $0x4c] sm:$0xf]
    %v86 = vld [vmem:[%s1 + $0x50] sm:$0xf]
    %v87 = vld [vmem:[%s1 + $0x54] sm:$0xf]
    %v88 = vld [vmem:[%s1 + $0x58] sm:$0xf]
    %v89 = vld [vmem:[%s1 + $0x5c] sm:$0xf]
    %v90 = vld [vmem:[%s1 + $0x60] sm:$0xf]
    %v91 = vld [vmem:[%s1 + $0x64] sm:$0xf]
    %v92 = vld [vmem:[%s1 + $0x68] sm:$0xf]
    %v93 = vld [vmem:[%s1 + $0x6c] sm:$0xf]
    %v94 = vld [vmem:[%s1 + $0x70] sm:$0xf]
    %v95 = vld [vmem:[%s1 + $0x74] sm:$0xf]
    %v96 = vld [vmem:[%s1 + $0x78] sm:$0xf]
    %v97 = vld [vmem:[%s1 + $0x7c] sm:$0xf]
    %v98 = vld [vmem:[%s1 + $0x80] sm:$0xf]
    %v99 = vld [vmem:[%s1 + $0x84] sm:$0xf]
    %v100 = vld [vmem:[%s1 + $0x88] sm:$0xf]
    %v101 = vld [vmem:[%s1 + $0x8c] sm:$0xf]
    %v102 = vld [vmem:[%s1 + $0x90] sm:$0xf]
    %v103 = vld [vmem:[%s1 + $0x94] sm:$0xf]
    %v104 = vld [vmem:[%s1 + $0x98] sm:$0xf]
    %v105 = vld [vmem:[%s1 + $0x9c] sm:$0xf]
    %v106 = vld [vmem:[%s1 + $0xa0] sm:$0xf]
    %v107 = vld [vmem:[%s1 + $0xa4] sm:$0xf]
    %v108 = vld [vmem:[%s1 + $0xa8] sm:$0xf]
    %v109 = vld [vmem:[%s1 + $0xac] sm:$0xf]
    %v110 = vld [vmem:[%s1 + $0xb0] sm:$0xf]
    %v111 = vld [vmem:[%s1 + $0xb4] sm:$0xf]
    %v112 = vld [vmem:[%s1 + $0xb8] sm:$0xf]
    %v113 = vld [vmem:[%s1 + $0xbc] sm:$0xf]
    %v114 = vld [vmem:[%s1 + $0xc0] sm:$0xf]
    %v115 = vld [vmem:[%s1 + $0xc4] sm:$0xf]
    %v116 = vld [vmem:[%s1 + $0xc8] sm:$0xf]
    %v117 = vld [vmem:[%s1 + $0xcc] sm:$0xf]
    %v118 = vld [vmem:[%s1 + $0xd0] sm:$0xf]
    %v119 = vld [vmem:[%s1 + $0xd4] sm:$0xf]
    %v120 = vld [vmem:[%s1 + $0xd8] sm:$0xf]
    %v121 = vld [vmem:[%s1 + $0xdc] sm:$0xf]
    %v122 = vld [vmem:[%s1 + $0xe0] sm:$0xf]
    %v123 = vld [vmem:[%s1 + $0xe4] sm:$0xf]
    %v124 = vld [vmem:[%s1 + $0xe8] sm:$0xf]
    %v125 = vld [vmem:[%s1 + $0xec] sm:$0xf]
    %v126 = vld [vmem:[%s1 + $0xf0] sm:$0xf]
    %v127 = vld [vmem:[%s1 + $0xf4] sm:$0xf]
    %v128 = vld [vmem:[%s1 + $0xf8] sm:$0xf]
    %v129 = vld [vmem:[%s1 + $0xfc] sm:$0xf]
    %v130 = vld [vmem:[%s1 + $0x100] sm:$0xf]
    %v131 = vld [vmem:[%s1 + $0x104] sm:$0xf]
    %v132 = vld [vmem:[%s1 + $0x108] sm:$0xf]
    %v133 = vld [vmem:[%s1 + $0x10c] sm:$0xf]
    %v134 = vld [vmem:[%s1 + $0x110] sm:$0xf]
    %v135 = vld [vmem:[%s1 + $0x114] sm:$0xf]
    %v136 = vld [vmem:[%s1 + $0x118] sm:$0xf]
    %v137 = vld [vmem:[%s1 + $0x11c] sm:$0xf]
    %v138 = vld [vmem:[%s1 + $0x120] sm:$0xf]
    %v139 = vld [vmem:[%s1 + $0x124] sm:$0xf]
    %v140 = vld [vmem:[%s1 + $0x128] sm:$0xf]
    %v141 = vld [vmem:[%s1 + $0x12c] sm:$0xf]
    %v142 = vld [vmem:[%s1 + $0x130] sm:$0xf]
    %v143 = vld [vmem:[%s1 + $0x134] sm:$0xf]
    %v144 = vld [vmem:[%s1 + $0x138] sm:$0xf]
    %v145 = vld [vmem:[%s1 + $0x13c] sm:$0xf]
    %v146 = vld [vmem:[%s1 + $0x140] sm:$0xf]
    %v147 = vld [vmem:[%s1 + $0x144] sm:$0xf]
    %v148 = vld [vmem:[%s1 + $0x148] sm:$0xf]
    %v149 = vld [vmem:[%s1 + $0x14c] sm:$0xf]
    %v150 = vld [vmem:[%s1 + $0x150] sm:$0xf]
    %v151 = vld [vmem:[%s1 + $0x154] sm:$0xf]
    %v152 = vld [vmem:[%s1 + $0x158] sm:$0xf]
    %v153 = vld [vmem:[%s1 + $0x15c] sm:$0xf]
    %v154 = vld [vmem:[%s1 + $0x160] sm:$0xf]
    %v155 = vld [vmem:[%s1 + $0x164] sm:$0xf]
    %v156 = vld [vmem:[%s1 + $0x168] sm:$0xf]
    %v157 = vld [vmem:[%s1 + $0x16c] sm:$0xf]
    %v158 = vld [vmem:[%s1 + $0x170] sm:$0xf]
    %v159 = vld [vmem:[%s1 + $0x174] sm:$0xf]
    %v160 = vld [vmem:[%s1 + $0x178] sm:$0xf]
    %v161 = vld [vmem:[%s1 + $0x17c] sm:$0xf]
    %v162 = vld [vmem:[%s1 + $0x180] sm:$0xf]
    %v163 = vld [vmem:[%s1 + $0x184] sm:$0xf]
    %v164 = vld [vmem:[%s2] sm:$0x1]
    %v166 = vlaneseq
    %v167 = vshrl.u32 %v166, 7
    %v168 = vsub.s32 0, %v167
    %v169 = vrot.slane %v164, %v168
    %v203 = vunpack.c.l.b16 %v34
    %v204 = vunpack.c.h.b16 %v34
    %v205 = vunpack.c.l.b16 %v35
    %v206 = vunpack.c.h.b16 %v35
    %v207 = vunpack.c.l.b16 %v36
    %v208 = vunpack.c.h.b16 %v36
    %v209 = vunpack.c.l.b16 %v37
    %v210 = vunpack.c.l.b16 %v38
    %v211 = vunpack.c.h.b16 %v38
    %v212 = vunpack.c.l.b16 %v39
    %v213 = vunpack.c.h.b16 %v39
    %v214 = vunpack.c.l.b16 %v40
    %v215 = vunpack.c.h.b16 %v40
    %v216 = vunpack.c.l.b16 %v41
    %v217 = vunpack.c.l.b16 %v42
    %v218 = vunpack.c.h.b16 %v42
    %v219 = vunpack.c.l.b16 %v43
    %v220 = vunpack.c.h.b16 %v43
    %v221 = vunpack.c.l.b16 %v44
    %v222 = vunpack.c.h.b16 %v44
    %v223 = vunpack.c.l.b16 %v45
    %v224 = vunpack.c.l.b16 %v46
    %v225 = vunpack.c.h.b16 %v46
    %v226 = vunpack.c.l.b16 %v47
    %v227 = vunpack.c.h.b16 %v47
    %v228 = vunpack.c.l.b16 %v48
    %v229 = vunpack.c.h.b16 %v48
    %v230 = vunpack.c.l.b16 %v49
    %v231 = vunpack.c.l.b16 %v50
    %v232 = vunpack.c.h.b16 %v50
    %v233 = vunpack.c.l.b16 %v51
    %v234 = vunpack.c.h.b16 %v51
    %v235 = vunpack.c.l.b16 %v52
    %v236 = vunpack.c.h.b16 %v52
    %v237 = vunpack.c.l.b16 %v53
    %v238 = vunpack.c.l.b16 %v54
    %v239 = vunpack.c.h.b16 %v54
    %v240 = vunpack.c.l.b16 %v55
    %v241 = vunpack.c.h.b16 %v55
    %v242 = vunpack.c.l.b16 %v56
    %v243 = vunpack.c.h.b16 %v56
    %v244 = vunpack.c.l.b16 %v57
    %v245 = vunpack.c.l.b16 %v58
    %v246 = vunpack.c.h.b16 %v58
    %v247 = vunpack.c.l.b16 %v59
    %v248 = vunpack.c.h.b16 %v59
    %v249 = vunpack.c.l.b16 %v60
    %v250 = vunpack.c.h.b16 %v60
    %v251 = vunpack.c.l.b16 %v61
    %v252 = vunpack.c.l.b16 %v62
    %v253 = vunpack.c.h.b16 %v62
    %v254 = vunpack.c.l.b16 %v63
    %v255 = vunpack.c.h.b16 %v63
    %v256 = vunpack.c.l.b16 %v64
    %v257 = vunpack.c.h.b16 %v64
    %v258 = vunpack.c.l.b16 %v65
    %v259 = vpack.c.b16 %v210, %v203
    %v260 = vpack.c.b16 %v211, %v204
    %v261 = vpack.c.b16 %v212, %v205
    %v262 = vpack.c.b16 %v213, %v206
    %v263 = vpack.c.b16 %v214, %v207
    %v264 = vpack.c.b16 %v215, %v208
    %v265 = vpack.c.b16 %v216, %v209
    %v266 = vpack.c.b16 %v224, %v217
    %v267 = vpack.c.b16 %v225, %v218
    %v268 = vpack.c.b16 %v226, %v219
    %v269 = vpack.c.b16 %v227, %v220
    %v270 = vpack.c.b16 %v228, %v221
    %v271 = vpack.c.b16 %v229, %v222
    %v272 = vpack.c.b16 %v230, %v223
    %v273 = vpack.c.b16 %v238, %v231
    %v274 = vpack.c.b16 %v239, %v232
    %v275 = vpack.c.b16 %v240, %v233
    %v276 = vpack.c.b16 %v241, %v234
    %v277 = vpack.c.b16 %v242, %v235
    %v278 = vpack.c.b16 %v243, %v236
    %v279 = vpack.c.b16 %v244, %v237
    %v280 = vpack.c.b16 %v252, %v245
    %v281 = vpack.c.b16 %v253, %v246
    %v282 = vpack.c.b16 %v254, %v247
    %v283 = vpack.c.b16 %v255, %v248
    %v284 = vpack.c.b16 %v256, %v249
    %v285 = vpack.c.b16 %v257, %v250
    %v286 = vpack.c.b16 %v258, %v251
    %v409 = vunpack.c.l.b16 %v66
    %v410 = vunpack.c.l.b16 %v67
    %v411 = vunpack.c.l.b16 %v68
    %v412 = vunpack.c.l.b16 %v69
    %v413 = vunpack.c.l.b16 %v70
    %v414 = vunpack.c.l.b16 %v71
    %v415 = vunpack.c.l.b16 %v72
    %v416 = vunpack.c.l.b16 %v73
    %v417 = vunpack.c.l.b16 %v74
    %v418 = vunpack.c.l.b16 %v75
    %v419 = vunpack.c.l.b16 %v76
    %v420 = vunpack.c.l.b16 %v77
    %v421 = vunpack.c.l.b16 %v78
    %v422 = vunpack.c.l.b16 %v79
    %v423 = vunpack.c.l.b16 %v80
    %v424 = vunpack.c.l.b16 %v81
    %v425 = vunpack.c.l.b16 %v82
    %v426 = vunpack.c.l.b16 %v83
    %v427 = vunpack.c.l.b16 %v84
    %v428 = vunpack.c.l.b16 %v85
    %v429 = vunpack.c.l.b16 %v86
    %v430 = vunpack.c.l.b16 %v87
    %v431 = vunpack.c.l.b16 %v88
    %v432 = vunpack.c.l.b16 %v89
    %v433 = vunpack.c.l.b16 %v90
    %v434 = vunpack.c.l.b16 %v91
    %v435 = vunpack.c.l.b16 %v92
    %v436 = vunpack.c.l.b16 %v93
    %v437 = vunpack.c.l.b16 %v94
    %v438 = vunpack.c.l.b16 %v95
    %v439 = vunpack.c.l.b16 %v96
    %v440 = vunpack.c.l.b16 %v97
    %v441 = vunpack.c.l.b16 %v98
    %v442 = vunpack.c.l.b16 %v99
    %v443 = vunpack.c.l.b16 %v100
    %v444 = vunpack.c.l.b16 %v101
    %v445 = vunpack.c.l.b16 %v102
    %v446 = vunpack.c.l.b16 %v103
    %v447 = vunpack.c.l.b16 %v104
    %v448 = vunpack.c.l.b16 %v105
    %v449 = vunpack.c.l.b16 %v106
    %v450 = vunpack.c.l.b16 %v107
    %v451 = vunpack.c.l.b16 %v108
    %v452 = vunpack.c.l.b16 %v109
    %v453 = vunpack.c.l.b16 %v110
    %v454 = vunpack.c.l.b16 %v111
    %v455 = vunpack.c.l.b16 %v112
    %v456 = vunpack.c.l.b16 %v113
    %v457 = vunpack.c.l.b16 %v114
    %v458 = vunpack.c.l.b16 %v115
    %v459 = vunpack.c.l.b16 %v116
    %v460 = vunpack.c.l.b16 %v117
    %v461 = vunpack.c.l.b16 %v118
    %v462 = vunpack.c.l.b16 %v119
    %v463 = vunpack.c.l.b16 %v120
    %v464 = vunpack.c.l.b16 %v121
    %v465 = vunpack.c.l.b16 %v122
    %v466 = vunpack.c.l.b16 %v123
    %v467 = vunpack.c.l.b16 %v124
    %v468 = vunpack.c.l.b16 %v125
    %v469 = vunpack.c.l.b16 %v126
    %v470 = vunpack.c.l.b16 %v127
    %v471 = vunpack.c.l.b16 %v128
    %v472 = vunpack.c.l.b16 %v129
    %v473 = vunpack.c.l.b16 %v130
    %v474 = vunpack.c.l.b16 %v131
    %v475 = vunpack.c.l.b16 %v132
    %v476 = vunpack.c.l.b16 %v133
    %v477 = vunpack.c.l.b16 %v134
    %v478 = vunpack.c.l.b16 %v135
    %v479 = vunpack.c.l.b16 %v136
    %v480 = vunpack.c.l.b16 %v137
    %v481 = vunpack.c.l.b16 %v138
    %v482 = vunpack.c.l.b16 %v139
    %v483 = vunpack.c.l.b16 %v140
    %v484 = vunpack.c.l.b16 %v141
    %v485 = vunpack.c.l.b16 %v142
    %v486 = vunpack.c.l.b16 %v143
    %v487 = vunpack.c.l.b16 %v144
    %v488 = vunpack.c.l.b16 %v145
    %v489 = vunpack.c.l.b16 %v146
    %v490 = vunpack.c.l.b16 %v147
    %v491 = vunpack.c.l.b16 %v148
    %v492 = vunpack.c.l.b16 %v149
    %v493 = vunpack.c.l.b16 %v150
    %v494 = vunpack.c.l.b16 %v151
    %v495 = vunpack.c.l.b16 %v152
    %v496 = vunpack.c.l.b16 %v153
    %v497 = vunpack.c.l.b16 %v154
    %v498 = vunpack.c.l.b16 %v155
    %v499 = vunpack.c.l.b16 %v156
    %v500 = vunpack.c.l.b16 %v157
    %v501 = vunpack.c.l.b16 %v158
    %v502 = vunpack.c.l.b16 %v159
    %v503 = vunpack.c.l.b16 %v160
    %v504 = vunpack.c.l.b16 %v161
    %v505 = vunpack.c.l.b16 %v162
    %v506 = vunpack.c.l.b16 %v163
    %v507 = vpack.c.b16 %v410, %v409
    %v508 = vpack.c.b16 %v412, %v411
    %v509 = vpack.c.b16 %v414, %v413
    %v510 = vpack.c.b16 %v416, %v415
    %v511 = vpack.c.b16 %v418, %v417
    %v512 = vpack.c.b16 %v420, %v419
    %v513 = vpack.c.b16 %v422, %v421
    %v514 = vpack.c.b16 %v424, %v423
    %v515 = vpack.c.b16 %v426, %v425
    %v516 = vpack.c.b16 %v428, %v427
    %v517 = vpack.c.b16 %v430, %v429
    %v518 = vpack.c.b16 %v432, %v431
    %v519 = vpack.c.b16 %v434, %v433
    %v520 = vpack.c.b16 %v436, %v435
    %v521 = vpack.c.b16 %v438, %v437
    %v522 = vpack.c.b16 %v440, %v439
    %v523 = vpack.c.b16 %v442, %v441
    %v524 = vpack.c.b16 %v444, %v443
    %v525 = vpack.c.b16 %v446, %v445
    %v526 = vpack.c.b16 %v448, %v447
    %v527 = vpack.c.b16 %v450, %v449
    %v528 = vpack.c.b16 %v452, %v451
    %v529 = vpack.c.b16 %v454, %v453
    %v530 = vpack.c.b16 %v456, %v455
    %v531 = vpack.c.b16 %v458, %v457
    %v532 = vpack.c.b16 %v460, %v459
    %v533 = vpack.c.b16 %v462, %v461
    %v534 = vpack.c.b16 %v464, %v463
    %v535 = vpack.c.b16 %v466, %v465
    %v536 = vpack.c.b16 %v468, %v467
    %v537 = vpack.c.b16 %v470, %v469
    %v538 = vpack.c.b16 %v472, %v471
    %v539 = vpack.c.b16 %v474, %v473
    %v540 = vpack.c.b16 %v476, %v475
    %v541 = vpack.c.b16 %v478, %v477
    %v542 = vpack.c.b16 %v480, %v479
    %v543 = vpack.c.b16 %v482, %v481
    %v544 = vpack.c.b16 %v484, %v483
    %v545 = vpack.c.b16 %v486, %v485
    %v546 = vpack.c.b16 %v488, %v487
    %v547 = vpack.c.b16 %v490, %v489
    %v548 = vpack.c.b16 %v492, %v491
    %v549 = vpack.c.b16 %v494, %v493
    %v550 = vpack.c.b16 %v496, %v495
    %v551 = vpack.c.b16 %v498, %v497
    %v552 = vpack.c.b16 %v500, %v499
    %v553 = vpack.c.b16 %v502, %v501
    %v554 = vpack.c.b16 %v504, %v503
    %v555 = vpack.c.b16 %v506, %v505
    %vm605 = vcmask 130048
    %v607 = vsel %vm605, %v265, 0
    %v610 = vsel %vm605, %v272, 0
    %v613 = vsel %vm605, %v279, 0
    %v616 = vsel %vm605, %v286, 0
    %618 = vmatprep.subr.bf16.mxu0 0
    %619 = vmatpush1.bf16.msra.mxu0 %v514
    %620 = vmatprep.subr.bf16.mxu0 0
    %621 = vmatpush1.bf16.msra.mxu0 %v513
    %622 = vmatprep.subr.bf16.mxu0 0
    %623 = vmatpush1.bf16.msra.mxu0 %v512
    %624 = vmatprep.subr.bf16.mxu0 0
    %625 = vmatpush1.bf16.msra.mxu0 %v511
    %626 = vmatprep.subr.bf16.mxu0 0
    %627 = vmatpush1.bf16.msra.mxu0 %v510
    %628 = vmatprep.subr.bf16.mxu0 0
    %629 = vmatpush1.bf16.msra.mxu0 %v509
    %630 = vmatprep.subr.bf16.mxu0 0
    %631 = vmatpush1.bf16.msra.mxu0 %v508
    %632 = vmatprep.subr.bf16.mxu0 0
    %633 = vmatpush1.bf16.msra.mxu0 %v507
    %634 = vmatprep.subr.bf16.mxu0 0
    %635 = vmatpush2.bf16.msra.mxu0 %v522
    %636 = vmatprep.subr.bf16.mxu0 0
    %637 = vmatpush2.bf16.msra.mxu0 %v521
    %638 = vmatprep.subr.bf16.mxu0 0
    %639 = vmatpush2.bf16.msra.mxu0 %v520
    %640 = vmatprep.subr.bf16.mxu0 0
    %641 = vmatpush2.bf16.msra.mxu0 %v519
    %642 = vmatprep.subr.bf16.mxu0 0
    %643 = vmatpush2.bf16.msra.mxu0 %v518
    %644 = vmatprep.subr.bf16.mxu0 0
    %645 = vmatpush2.bf16.msra.mxu0 %v517
    %646 = vmatprep.subr.bf16.mxu0 0
    %647 = vmatpush2.bf16.msra.mxu0 %v516
    %648 = vmatprep.subr.bf16.mxu0 0
    %649 = vmatpush2.bf16.msra.mxu0 %v515
    %650 = vmatprep.mubr.bf16.mxu0 %v260
    %651 = vmatmul.mubr.bf16.gmra.mxu0 %v259
    %v652 = vpop.f32.mrf.mxu0
    %v653 = vadd.f32 %v169, %v652
    %v654 = vpop.f32.mrf.mxu0
    %v655 = vpop.f32.mrf.mxu0
    %v656 = vadd.f32 %v169, %v655
    %v657 = vpop.f32.mrf.mxu0
    %658 = vmatprep.mubr.bf16.mxu0 %v267
    %659 = vmatmul.mubr.bf16.gmra.mxu0 %v266
    %v660 = vpop.f32.mrf.mxu0
    %v661 = vadd.f32 %v169, %v660
    %v662 = vpop.f32.mrf.mxu0
    %v663 = vpop.f32.mrf.mxu0
    %v664 = vadd.f32 %v169, %v663
    %v665 = vpop.f32.mrf.mxu0
    %666 = vmatprep.mubr.bf16.mxu0 %v274
    %667 = vmatmul.mubr.bf16.gmra.mxu0 %v273
    %v668 = vpop.f32.mrf.mxu0
    %v669 = vadd.f32 %v169, %v668
    %v670 = vpop.f32.mrf.mxu0
    %v671 = vpop.f32.mrf.mxu0
    %v672 = vadd.f32 %v169, %v671
    %v673 = vpop.f32.mrf.mxu0
    %674 = vmatprep.mubr.bf16.mxu0 %v281
    %675 = vmatmul.mubr.bf16.gmra.mxu0 %v280
    %v676 = vpop.f32.mrf.mxu0
    %v677 = vadd.f32 %v169, %v676
    %v678 = vpop.f32.mrf.mxu0
    %v679 = vpop.f32.mrf.mxu0
    %v680 = vadd.f32 %v169, %v679
    %v681 = vpop.f32.mrf.mxu0
    %682 = vdwg.mxu0
    %683 = vmatprep.subr.bf16.mxu0 0
    %684 = vmatpush1.bf16.msra.mxu0 %v530
    %685 = vmatprep.subr.bf16.mxu0 0
    %686 = vmatpush1.bf16.msra.mxu0 %v529
    %687 = vmatprep.subr.bf16.mxu0 0
    %688 = vmatpush1.bf16.msra.mxu0 %v528
    %689 = vmatprep.subr.bf16.mxu0 0
    %690 = vmatpush1.bf16.msra.mxu0 %v527
    %691 = vmatprep.subr.bf16.mxu0 0
    %692 = vmatpush1.bf16.msra.mxu0 %v526
    %693 = vmatprep.subr.bf16.mxu0 0
    %694 = vmatpush1.bf16.msra.mxu0 %v525
    %695 = vmatprep.subr.bf16.mxu0 0
    %696 = vmatpush1.bf16.msra.mxu0 %v524
    %697 = vmatprep.subr.bf16.mxu0 0
    %698 = vmatpush1.bf16.msra.mxu0 %v523
    %699 = vmatprep.subr.bf16.mxu0 0
    %700 = vmatpush2.bf16.msra.mxu0 %v538
    %701 = vmatprep.subr.bf16.mxu0 0
    %702 = vmatpush2.bf16.msra.mxu0 %v537
    %703 = vmatprep.subr.bf16.mxu0 0
    %704 = vmatpush2.bf16.msra.mxu0 %v536
    %705 = vmatprep.subr.bf16.mxu0 0
    %706 = vmatpush2.bf16.msra.mxu0 %v535
    %707 = vmatprep.subr.bf16.mxu0 0
    %708 = vmatpush2.bf16.msra.mxu0 %v534
    %709 = vmatprep.subr.bf16.mxu0 0
    %710 = vmatpush2.bf16.msra.mxu0 %v533
    %711 = vmatprep.subr.bf16.mxu0 0
    %712 = vmatpush2.bf16.msra.mxu0 %v532
    %713 = vmatprep.subr.bf16.mxu0 0
    %714 = vmatpush2.bf16.msra.mxu0 %v531
    %715 = vmatprep.mubr.bf16.mxu0 %v262
    %716 = vmatmul.mubr.bf16.gmra.mxu0 %v261
    %v717 = vpop.f32.mrf.mxu0
    %v718 = vadd.f32 %v653, %v717
    %v719 = vpop.f32.mrf.mxu0
    %v720 = vpop.f32.mrf.mxu0
    %v721 = vadd.f32 %v656, %v720
    %v722 = vpop.f32.mrf.mxu0
    %723 = vmatprep.mubr.bf16.mxu0 %v269
    %724 = vmatmul.mubr.bf16.gmra.mxu0 %v268
    %v725 = vpop.f32.mrf.mxu0
    %v726 = vadd.f32 %v661, %v725
    %v727 = vpop.f32.mrf.mxu0
    %v728 = vpop.f32.mrf.mxu0
    %v729 = vadd.f32 %v664, %v728
    %v730 = vpop.f32.mrf.mxu0
    %731 = vmatprep.mubr.bf16.mxu0 %v276
    %732 = vmatmul.mubr.bf16.gmra.mxu0 %v275
    %v733 = vpop.f32.mrf.mxu0
    %v734 = vadd.f32 %v669, %v733
    %v735 = vpop.f32.mrf.mxu0
    %v736 = vpop.f32.mrf.mxu0
    %v737 = vadd.f32 %v672, %v736
    %v738 = vpop.f32.mrf.mxu0
    %739 = vmatprep.mubr.bf16.mxu0 %v283
    %740 = vmatmul.mubr.bf16.gmra.mxu0 %v282
    %v741 = vpop.f32.mrf.mxu0
    %v742 = vadd.f32 %v677, %v741
    %v743 = vpop.f32.mrf.mxu0
    %v744 = vpop.f32.mrf.mxu0
    %v745 = vadd.f32 %v680, %v744
    %v746 = vpop.f32.mrf.mxu0
    %747 = vdwg.mxu0
    %748 = vmatprep.subr.bf16.mxu0 0
    %749 = vmatpush1.bf16.msra.mxu0 %v546
    %750 = vmatprep.subr.bf16.mxu0 0
    %751 = vmatpush1.bf16.msra.mxu0 %v545
    %752 = vmatprep.subr.bf16.mxu0 0
    %753 = vmatpush1.bf16.msra.mxu0 %v544
    %754 = vmatprep.subr.bf16.mxu0 0
    %755 = vmatpush1.bf16.msra.mxu0 %v543
    %756 = vmatprep.subr.bf16.mxu0 0
    %757 = vmatpush1.bf16.msra.mxu0 %v542
    %758 = vmatprep.subr.bf16.mxu0 0
    %759 = vmatpush1.bf16.msra.mxu0 %v541
    %760 = vmatprep.subr.bf16.mxu0 0
    %761 = vmatpush1.bf16.msra.mxu0 %v540
    %762 = vmatprep.subr.bf16.mxu0 0
    %763 = vmatpush1.bf16.msra.mxu0 %v539
    %764 = vmatprep.subr.bf16.mxu0 0
    %765 = vmatpush2.bf16.msra.mxu0 %v554
    %766 = vmatprep.subr.bf16.mxu0 0
    %767 = vmatpush2.bf16.msra.mxu0 %v553
    %768 = vmatprep.subr.bf16.mxu0 0
    %769 = vmatpush2.bf16.msra.mxu0 %v552
    %770 = vmatprep.subr.bf16.mxu0 0
    %771 = vmatpush2.bf16.msra.mxu0 %v551
    %772 = vmatprep.subr.bf16.mxu0 0
    %773 = vmatpush2.bf16.msra.mxu0 %v550
    %774 = vmatprep.subr.bf16.mxu0 0
    %775 = vmatpush2.bf16.msra.mxu0 %v549
    %776 = vmatprep.subr.bf16.mxu0 0
    %777 = vmatpush2.bf16.msra.mxu0 %v548
    %778 = vmatprep.subr.bf16.mxu0 0
    %779 = vmatpush2.bf16.msra.mxu0 %v547
    %780 = vmatprep.mubr.bf16.mxu0 %v264
    %781 = vmatmul.mubr.bf16.gmra.mxu0 %v263
    %v782 = vpop.f32.mrf.mxu0
    %v783 = vadd.f32 %v718, %v782
    %v784 = vpop.f32.mrf.mxu0
    %v785 = vpop.f32.mrf.mxu0
    %v786 = vadd.f32 %v721, %v785
    %v787 = vpop.f32.mrf.mxu0
    %788 = vmatprep.mubr.bf16.mxu0 %v271
    %789 = vmatmul.mubr.bf16.gmra.mxu0 %v270
    %v790 = vpop.f32.mrf.mxu0
    %v791 = vadd.f32 %v726, %v790
    %v792 = vpop.f32.mrf.mxu0
    %v793 = vpop.f32.mrf.mxu0
    %v794 = vadd.f32 %v729, %v793
    %v795 = vpop.f32.mrf.mxu0
    %796 = vmatprep.mubr.bf16.mxu0 %v278
    %797 = vmatmul.mubr.bf16.gmra.mxu0 %v277
    %v798 = vpop.f32.mrf.mxu0
    %v799 = vadd.f32 %v734, %v798
    %v800 = vpop.f32.mrf.mxu0
    %v801 = vpop.f32.mrf.mxu0
    %v802 = vadd.f32 %v737, %v801
    %v803 = vpop.f32.mrf.mxu0
    %804 = vmatprep.mubr.bf16.mxu0 %v285
    %805 = vmatmul.mubr.bf16.gmra.mxu0 %v284
    %v806 = vpop.f32.mrf.mxu0
    %v807 = vadd.f32 %v742, %v806
    %v808 = vpop.f32.mrf.mxu0
    %v809 = vpop.f32.mrf.mxu0
    %v810 = vadd.f32 %v745, %v809
    %v811 = vpop.f32.mrf.mxu0
    %812 = vdwg.mxu0
    %813 = vmatprep.subr.bf16.mxu0 0
    %814 = vmatpush1.bf16.msra.mxu0 0
    %815 = vmatprep.subr.bf16.mxu0 0
    %816 = vmatpush1.bf16.msra.mxu0 0
    %817 = vmatprep.subr.bf16.mxu0 0
    %818 = vmatpush1.bf16.msra.mxu0 0
    %819 = vmatprep.subr.bf16.mxu0 0
    %820 = vmatpush1.bf16.msra.mxu0 0
    %821 = vmatprep.subr.bf16.mxu0 0
    %822 = vmatpush1.bf16.msra.mxu0 0
    %823 = vmatprep.subr.bf16.mxu0 0
    %824 = vmatpush1.bf16.msra.mxu0 0
    %825 = vmatprep.subr.bf16.mxu0 0
    %826 = vmatpush1.bf16.msra.mxu0 0
    %827 = vmatprep.subr.bf16.mxu0 0
    %828 = vmatpush1.bf16.msra.mxu0 %v555
    %829 = vmatprep.subr.bf16.mxu0 0
    %830 = vmatpush2.bf16.msra.mxu0 0
    %831 = vmatprep.subr.bf16.mxu0 0
    %832 = vmatpush2.bf16.msra.mxu0 0
    %833 = vmatprep.subr.bf16.mxu0 0
    %834 = vmatpush2.bf16.msra.mxu0 0
    %835 = vmatprep.subr.bf16.mxu0 0
    %836 = vmatpush2.bf16.msra.mxu0 0
    %837 = vmatprep.subr.bf16.mxu0 0
    %838 = vmatpush2.bf16.msra.mxu0 0
    %839 = vmatprep.subr.bf16.mxu0 0
    %840 = vmatpush2.bf16.msra.mxu0 0
    %841 = vmatprep.subr.bf16.mxu0 0
    %842 = vmatpush2.bf16.msra.mxu0 0
    %843 = vmatprep.subr.bf16.mxu0 0
    %844 = vmatpush2.bf16.msra.mxu0 0
    %845 = vmatprep.mubr.bf16.mxu0 0
    %846 = vmatmul.mubr.bf16.gmra.mxu0 %v607
    %v847 = vpop.f32.mrf.mxu0
    %v848 = vadd.f32 %v783, %v847
    %v849 = vpop.f32.mrf.mxu0
    %v850 = vpop.f32.mrf.mxu0
    %v851 = vadd.f32 %v786, %v850
    %v852 = vpop.f32.mrf.mxu0
    %853 = vmatprep.mubr.bf16.mxu0 0
    %854 = vmatmul.mubr.bf16.gmra.mxu0 %v610
    %v855 = vpop.f32.mrf.mxu0
    %v856 = vadd.f32 %v791, %v855
    %v857 = vpop.f32.mrf.mxu0
    %v858 = vpop.f32.mrf.mxu0
    %v859 = vadd.f32 %v794, %v858
    %v860 = vpop.f32.mrf.mxu0
    %861 = vmatprep.mubr.bf16.mxu0 0
    %862 = vmatmul.mubr.bf16.gmra.mxu0 %v613
    %v863 = vpop.f32.mrf.mxu0
    %v864 = vadd.f32 %v799, %v863
    %v865 = vpop.f32.mrf.mxu0
    %v866 = vpop.f32.mrf.mxu0
    %v867 = vadd.f32 %v802, %v866
    %v868 = vpop.f32.mrf.mxu0
    %869 = vmatprep.mubr.bf16.mxu0 0
    %870 = vmatmul.mubr.bf16.gmra.mxu0 %v616
    %v871 = vpop.f32.mrf.mxu0
    %v872 = vadd.f32 %v807, %v871
    %v873 = vpop.f32.mrf.mxu0
    %v874 = vpop.f32.mrf.mxu0
    %v875 = vadd.f32 %v810, %v874
    %v876 = vpop.f32.mrf.mxu0
    %877 = vdwg.mxu0
    %vm878 = vcmp.ge.f32.partialorder %v848, 0.0
    %vm879 = vcmp.ge.f32.partialorder %v851, 0.0
    %vm880 = vcmp.ge.f32.partialorder %v856, 0.0
    %vm881 = vcmp.ge.f32.partialorder %v859, 0.0
    %vm882 = vcmp.ge.f32.partialorder %v864, 0.0
    %vm883 = vcmp.ge.f32.partialorder %v867, 0.0
    %vm884 = vcmp.ge.f32.partialorder %v872, 0.0
    %vm885 = vcmp.ge.f32.partialorder %v875, 0.0
    %v886 = vmul.f32 %v848, 0.01
    %v887 = vmul.f32 %v851, 0.01
    %v888 = vmul.f32 %v856, 0.01
    %v889 = vmul.f32 %v859, 0.01
    %v890 = vmul.f32 %v864, 0.01
    %v891 = vmul.f32 %v867, 0.01
    %v892 = vmul.f32 %v872, 0.01
    %v893 = vmul.f32 %v875, 0.01
    %v894 = vsel %vm878, %v848, %v886
    %v895 = vsel %vm879, %v851, %v887
    %v896 = vsel %vm880, %v856, %v888
    %v897 = vsel %vm881, %v859, %v889
    %v898 = vsel %vm882, %v864, %v890
    %v899 = vsel %vm883, %v867, %v891
    %v900 = vsel %vm884, %v872, %v892
    %v901 = vsel %vm885, %v875, %v893
    %v902 = vpack.c.bf16 %v895, %v894
    %v903 = vpack.c.bf16 %v897, %v896
    %v904 = vpack.c.bf16 %v899, %v898
    %v905 = vpack.c.bf16 %v901, %v900
    %v906 = vld [vmem:[%s3] sm:$0xf]
    %v907 = vld [vmem:[%s3 + $0x4] sm:$0xf]
    %v908 = vld [vmem:[%s3 + $0x8] sm:$0xf]
    %v909 = vld [vmem:[%s3 + $0xc] sm:$0xf]
    %v910 = vld [vmem:[%s3 + $0x10] sm:$0xf]
    %v911 = vld [vmem:[%s3 + $0x14] sm:$0xf]
    %v912 = vld [vmem:[%s3 + $0x18] sm:$0xf]
    %v913 = vld [vmem:[%s3 + $0x1c] sm:$0xf]
    %v914 = vld [vmem:[%s4] sm:$0x1]
    %v916 = vlaneseq
    %v917 = vshrl.u32 %v916, 7
    %v918 = vsub.s32 0, %v917
    %v919 = vrot.slane %v914, %v918
    %v929 = vunpack.c.l.b16 %v906
    %v930 = vunpack.c.l.b16 %v907
    %v931 = vunpack.c.l.b16 %v908
    %v932 = vunpack.c.l.b16 %v909
    %v933 = vunpack.c.l.b16 %v910
    %v934 = vunpack.c.l.b16 %v911
    %v935 = vunpack.c.l.b16 %v912
    %v936 = vunpack.c.l.b16 %v913
    %v937 = vpack.c.b16 %v930, %v929
    %v938 = vpack.c.b16 %v932, %v931
    %v939 = vpack.c.b16 %v934, %v933
    %v940 = vpack.c.b16 %v936, %v935
    %vm945 = vcmask 523264
    %v947 = vsel %vm945, %v902, 0
    %v950 = vsel %vm945, %v903, 0
    %v953 = vsel %vm945, %v904, 0
    %v956 = vsel %vm945, %v905, 0
    %958 = vmatprep.subr.bf16.mxu0 0
    %959 = vmatpush1.bf16.msra.mxu0 0
    %960 = vmatprep.subr.bf16.mxu0 0
    %961 = vmatpush1.bf16.msra.mxu0 0
    %962 = vmatprep.subr.bf16.mxu0 0
    %963 = vmatpush1.bf16.msra.mxu0 0
    %964 = vmatprep.subr.bf16.mxu0 0
    %965 = vmatpush1.bf16.msra.mxu0 0
    %966 = vmatprep.subr.bf16.mxu0 0
    %967 = vmatpush1.bf16.msra.mxu0 %v940
    %968 = vmatprep.subr.bf16.mxu0 0
    %969 = vmatpush1.bf16.msra.mxu0 %v939
    %970 = vmatprep.subr.bf16.mxu0 0
    %971 = vmatpush1.bf16.msra.mxu0 %v938
    %972 = vmatprep.subr.bf16.mxu0 0
    %973 = vmatpush1.bf16.msra.mxu0 %v937
    %974 = vmatprep.subr.bf16.mxu0 0
    %975 = vmatpush2.bf16.msra.mxu0 0
    %976 = vmatprep.subr.bf16.mxu0 0
    %977 = vmatpush2.bf16.msra.mxu0 0
    %978 = vmatprep.subr.bf16.mxu0 0
    %979 = vmatpush2.bf16.msra.mxu0 0
    %980 = vmatprep.subr.bf16.mxu0 0
    %981 = vmatpush2.bf16.msra.mxu0 0
    %982 = vmatprep.subr.bf16.mxu0 0
    %983 = vmatpush2.bf16.msra.mxu0 0
    %984 = vmatprep.subr.bf16.mxu0 0
    %985 = vmatpush2.bf16.msra.mxu0 0
    %986 = vmatprep.subr.bf16.mxu0 0
    %987 = vmatpush2.bf16.msra.mxu0 0
    %988 = vmatprep.subr.bf16.mxu0 0
    %989 = vmatpush2.bf16.msra.mxu0 0
    %990 = vmatprep.mubr.bf16.mxu0 0
    %991 = vmatmul.mubr.bf16.gmra.mxu0 %v947
    %v992 = vpop.f32.mrf.mxu0
    %v993 = vadd.f32 %v919, %v992
    %v994 = vpop.f32.mrf.mxu0
    %v995 = vpop.f32.mrf.mxu0
    %v996 = vadd.f32 %v919, %v995
    %v997 = vpop.f32.mrf.mxu0
    %998 = vmatprep.mubr.bf16.mxu0 0
    %999 = vmatmul.mubr.bf16.gmra.mxu0 %v950
    %v1000 = vpop.f32.mrf.mxu0
    %v1001 = vadd.f32 %v919, %v1000
    %v1002 = vpop.f32.mrf.mxu0
    %v1003 = vpop.f32.mrf.mxu0
    %v1004 = vadd.f32 %v919, %v1003
    %v1005 = vpop.f32.mrf.mxu0
    %1006 = vmatprep.mubr.bf16.mxu0 0
    %1007 = vmatmul.mubr.bf16.gmra.mxu0 %v953
    %v1008 = vpop.f32.mrf.mxu0
    %v1009 = vadd.f32 %v919, %v1008
    %v1010 = vpop.f32.mrf.mxu0
    %v1011 = vpop.f32.mrf.mxu0
    %v1012 = vadd.f32 %v919, %v1011
    %v1013 = vpop.f32.mrf.mxu0
    %1014 = vmatprep.mubr.bf16.mxu0 0
    %1015 = vmatmul.mubr.bf16.gmra.mxu0 %v956
    %v1016 = vpop.f32.mrf.mxu0
    %v1017 = vadd.f32 %v919, %v1016
    %v1018 = vpop.f32.mrf.mxu0
    %v1019 = vpop.f32.mrf.mxu0
    %v1020 = vadd.f32 %v919, %v1019
    %v1021 = vpop.f32.mrf.mxu0
    %1022 = vdwg.mxu0
    %vm1023 = vcmp.ge.f32.partialorder %v993, 0.0
    %vm1024 = vcmp.ge.f32.partialorder %v996, 0.0
    %vm1025 = vcmp.ge.f32.partialorder %v1001, 0.0
    %vm1026 = vcmp.ge.f32.partialorder %v1004, 0.0
    %vm1027 = vcmp.ge.f32.partialorder %v1009, 0.0
    %vm1028 = vcmp.ge.f32.partialorder %v1012, 0.0
    %vm1029 = vcmp.ge.f32.partialorder %v1017, 0.0
    %vm1030 = vcmp.ge.f32.partialorder %v1020, 0.0
    %v1031 = vmul.f32 %v993, 0.01
    %v1032 = vmul.f32 %v996, 0.01
    %v1033 = vmul.f32 %v1001, 0.01
    %v1034 = vmul.f32 %v1004, 0.01
    %v1035 = vmul.f32 %v1009, 0.01
    %v1036 = vmul.f32 %v1012, 0.01
    %v1037 = vmul.f32 %v1017, 0.01
    %v1038 = vmul.f32 %v1020, 0.01
    %v1039 = vsel %vm1023, %v993, %v1031
    %v1040 = vsel %vm1024, %v996, %v1032
    %v1041 = vsel %vm1025, %v1001, %v1033
    %v1042 = vsel %vm1026, %v1004, %v1034
    %v1043 = vsel %vm1027, %v1009, %v1035
    %v1044 = vsel %vm1028, %v1012, %v1036
    %v1045 = vsel %vm1029, %v1017, %v1037
    %v1046 = vsel %vm1030, %v1020, %v1038
    %v1047 = vpack.c.bf16 %v1040, %v1039
    %v1048 = vpack.c.bf16 %v1042, %v1041
    %v1049 = vpack.c.bf16 %v1044, %v1043
    %v1050 = vpack.c.bf16 %v1046, %v1045
    %v1051 = vld [vmem:[%s5] sm:$0xf]
    %v1052 = vld [vmem:[%s5 + $0x4] sm:$0xf]
    %v1053 = vld [vmem:[%s5 + $0x8] sm:$0xf]
    %v1054 = vld [vmem:[%s5 + $0xc] sm:$0xf]
    %v1055 = vld [vmem:[%s6] sm:$0x1]
    %v1057 = vlaneseq
    %v1058 = vshrl.u32 %v1057, 7
    %v1059 = vsub.s32 0, %v1058
    %v1060 = vrot.slane %v1055, %v1059
    %v1066 = vunpack.c.l.b16 %v1051
    %v1067 = vunpack.c.l.b16 %v1052
    %v1068 = vunpack.c.l.b16 %v1053
    %v1069 = vunpack.c.l.b16 %v1054
    %v1070 = vpack.c.b16 %v1067, %v1066
    %v1071 = vpack.c.b16 %v1069, %v1068
    %vm1074 = vcmask 261120
    %v1076 = vsel %vm1074, %v1047, 0
    %v1079 = vsel %vm1074, %v1048, 0
    %v1082 = vsel %vm1074, %v1049, 0
    %v1085 = vsel %vm1074, %v1050, 0
    %1087 = vmatprep.subr.bf16.mxu0 0
    %1088 = vmatpush1.bf16.msra.mxu0 0
    %1089 = vmatprep.subr.bf16.mxu0 0
    %1090 = vmatpush1.bf16.msra.mxu0 0
    %1091 = vmatprep.subr.bf16.mxu0 0
    %1092 = vmatpush1.bf16.msra.mxu0 0
    %1093 = vmatprep.subr.bf16.mxu0 0
    %1094 = vmatpush1.bf16.msra.mxu0 0
    %1095 = vmatprep.subr.bf16.mxu0 0
    %1096 = vmatpush1.bf16.msra.mxu0 0
    %1097 = vmatprep.subr.bf16.mxu0 0
    %1098 = vmatpush1.bf16.msra.mxu0 0
    %1099 = vmatprep.subr.bf16.mxu0 0
    %1100 = vmatpush1.bf16.msra.mxu0 %v1071
    %1101 = vmatprep.subr.bf16.mxu0 0
    %1102 = vmatpush1.bf16.msra.mxu0 %v1070
    %1103 = vmatprep.subr.bf16.mxu0 0
    %1104 = vmatpush2.bf16.msra.mxu0 0
    %1105 = vmatprep.subr.bf16.mxu0 0
    %1106 = vmatpush2.bf16.msra.mxu0 0
    %1107 = vmatprep.subr.bf16.mxu0 0
    %1108 = vmatpush2.bf16.msra.mxu0 0
    %1109 = vmatprep.subr.bf16.mxu0 0
    %1110 = vmatpush2.bf16.msra.mxu0 0
    %1111 = vmatprep.subr.bf16.mxu0 0
    %1112 = vmatpush2.bf16.msra.mxu0 0
    %1113 = vmatprep.subr.bf16.mxu0 0
    %1114 = vmatpush2.bf16.msra.mxu0 0
    %1115 = vmatprep.subr.bf16.mxu0 0
    %1116 = vmatpush2.bf16.msra.mxu0 0
    %1117 = vmatprep.subr.bf16.mxu0 0
    %1118 = vmatpush2.bf16.msra.mxu0 0
    %1119 = vmatprep.mubr.bf16.mxu0 0
    %1120 = vmatmul.mubr.bf16.gmra.mxu0 %v1076
    %v1121 = vpop.f32.mrf.mxu0
    %v1122 = vadd.f32 %v1060, %v1121
    %v1123 = vpop.f32.mrf.mxu0
    %v1124 = vpop.f32.mrf.mxu0
    %v1125 = vadd.f32 %v1060, %v1124
    %v1126 = vpop.f32.mrf.mxu0
    %1127 = vmatprep.mubr.bf16.mxu0 0
    %1128 = vmatmul.mubr.bf16.gmra.mxu0 %v1079
    %v1129 = vpop.f32.mrf.mxu0
    %v1130 = vadd.f32 %v1060, %v1129
    %v1131 = vpop.f32.mrf.mxu0
    %v1132 = vpop.f32.mrf.mxu0
    %v1133 = vadd.f32 %v1060, %v1132
    %v1134 = vpop.f32.mrf.mxu0
    %1135 = vmatprep.mubr.bf16.mxu0 0
    %1136 = vmatmul.mubr.bf16.gmra.mxu0 %v1082
    %v1137 = vpop.f32.mrf.mxu0
    %v1138 = vadd.f32 %v1060, %v1137
    %v1139 = vpop.f32.mrf.mxu0
    %v1140 = vpop.f32.mrf.mxu0
    %v1141 = vadd.f32 %v1060, %v1140
    %v1142 = vpop.f32.mrf.mxu0
    %1143 = vmatprep.mubr.bf16.mxu0 0
    %1144 = vmatmul.mubr.bf16.gmra.mxu0 %v1085
    %v1145 = vpop.f32.mrf.mxu0
    %v1146 = vadd.f32 %v1060, %v1145
    %v1147 = vpop.f32.mrf.mxu0
    %v1148 = vpop.f32.mrf.mxu0
    %v1149 = vadd.f32 %v1060, %v1148
    %v1150 = vpop.f32.mrf.mxu0
    %1151 = vdwg.mxu0
    %vm1152 = vcmp.ge.f32.partialorder %v1122, 0.0
    %vm1153 = vcmp.ge.f32.partialorder %v1125, 0.0
    %vm1154 = vcmp.ge.f32.partialorder %v1130, 0.0
    %vm1155 = vcmp.ge.f32.partialorder %v1133, 0.0
    %vm1156 = vcmp.ge.f32.partialorder %v1138, 0.0
    %vm1157 = vcmp.ge.f32.partialorder %v1141, 0.0
    %vm1158 = vcmp.ge.f32.partialorder %v1146, 0.0
    %vm1159 = vcmp.ge.f32.partialorder %v1149, 0.0
    %v1160 = vmul.f32 %v1122, 0.01
    %v1161 = vmul.f32 %v1125, 0.01
    %v1162 = vmul.f32 %v1130, 0.01
    %v1163 = vmul.f32 %v1133, 0.01
    %v1164 = vmul.f32 %v1138, 0.01
    %v1165 = vmul.f32 %v1141, 0.01
    %v1166 = vmul.f32 %v1146, 0.01
    %v1167 = vmul.f32 %v1149, 0.01
    %v1168 = vsel %vm1152, %v1122, %v1160
    %v1169 = vsel %vm1153, %v1125, %v1161
    %v1170 = vsel %vm1154, %v1130, %v1162
    %v1171 = vsel %vm1155, %v1133, %v1163
    %v1172 = vsel %vm1156, %v1138, %v1164
    %v1173 = vsel %vm1157, %v1141, %v1165
    %v1174 = vsel %vm1158, %v1146, %v1166
    %v1175 = vsel %vm1159, %v1149, %v1167
    %v1176 = vpack.c.bf16 %v1169, %v1168
    %v1177 = vpack.c.bf16 %v1171, %v1170
    %v1178 = vpack.c.bf16 %v1173, %v1172
    %v1179 = vpack.c.bf16 %v1175, %v1174
    %v1180 = vld [vmem:[%s7] sm:$0xf]
    %v1181 = vld [vmem:[%s7 + $0x4] sm:$0xf]
    %v1182 = vld [vmem:[%s7 + $0x8] sm:$0xf]
    %v1183 = vld [vmem:[%s7 + $0xc] sm:$0xf]
    %v1184 = vld [vmem:[%s8] sm:$0x1]
    %v1186 = vlaneseq
    %v1187 = vshrl.u32 %v1186, 7
    %v1188 = vsub.s32 0, %v1187
    %v1189 = vrot.slane %v1184, %v1188
    %v1195 = vunpack.c.l.b16 %v1180
    %v1196 = vunpack.c.l.b16 %v1181
    %v1197 = vunpack.c.l.b16 %v1182
    %v1198 = vunpack.c.l.b16 %v1183
    %v1199 = vpack.c.b16 %v1196, %v1195
    %v1200 = vpack.c.b16 %v1198, %v1197
    %v1204 = vsel %vm1074, %v1176, 0
    %v1207 = vsel %vm1074, %v1177, 0
    %v1210 = vsel %vm1074, %v1178, 0
    %v1213 = vsel %vm1074, %v1179, 0
    %1215 = vmatprep.subr.bf16.mxu0 0
    %1216 = vmatpush1.bf16.msra.mxu0 0
    %1217 = vmatprep.subr.bf16.mxu0 0
    %1218 = vmatpush1.bf16.msra.mxu0 0
    %1219 = vmatprep.subr.bf16.mxu0 0
    %1220 = vmatpush1.bf16.msra.mxu0 0
    %1221 = vmatprep.subr.bf16.mxu0 0
    %1222 = vmatpush1.bf16.msra.mxu0 0
    %1223 = vmatprep.subr.bf16.mxu0 0
    %1224 = vmatpush1.bf16.msra.mxu0 0
    %1225 = vmatprep.subr.bf16.mxu0 0
    %1226 = vmatpush1.bf16.msra.mxu0 0
    %1227 = vmatprep.subr.bf16.mxu0 0
    %1228 = vmatpush1.bf16.msra.mxu0 %v1200
    %1229 = vmatprep.subr.bf16.mxu0 0
    %1230 = vmatpush1.bf16.msra.mxu0 %v1199
    %1231 = vmatprep.subr.bf16.mxu0 0
    %1232 = vmatpush2.bf16.msra.mxu0 0
    %1233 = vmatprep.subr.bf16.mxu0 0
    %1234 = vmatpush2.bf16.msra.mxu0 0
    %1235 = vmatprep.subr.bf16.mxu0 0
    %1236 = vmatpush2.bf16.msra.mxu0 0
    %1237 = vmatprep.subr.bf16.mxu0 0
    %1238 = vmatpush2.bf16.msra.mxu0 0
    %1239 = vmatprep.subr.bf16.mxu0 0
    %1240 = vmatpush2.bf16.msra.mxu0 0
    %1241 = vmatprep.subr.bf16.mxu0 0
    %1242 = vmatpush2.bf16.msra.mxu0 0
    %1243 = vmatprep.subr.bf16.mxu0 0
    %1244 = vmatpush2.bf16.msra.mxu0 0
    %1245 = vmatprep.subr.bf16.mxu0 0
    %1246 = vmatpush2.bf16.msra.mxu0 0
    %1247 = vmatprep.mubr.bf16.mxu0 0
    %1248 = vmatmul.mubr.bf16.gmra.mxu0 %v1204
    %v1249 = vpop.f32.mrf.mxu0
    %v1250 = vadd.f32 %v1189, %v1249
    %v1251 = vpop.f32.mrf.mxu0
    %v1252 = vpop.f32.mrf.mxu0
    %v1253 = vadd.f32 %v1189, %v1252
    %v1254 = vpop.f32.mrf.mxu0
    %1255 = vmatprep.mubr.bf16.mxu0 0
    %1256 = vmatmul.mubr.bf16.gmra.mxu0 %v1207
    %v1257 = vpop.f32.mrf.mxu0
    %v1258 = vadd.f32 %v1189, %v1257
    %v1259 = vpop.f32.mrf.mxu0
    %v1260 = vpop.f32.mrf.mxu0
    %v1261 = vadd.f32 %v1189, %v1260
    %v1262 = vpop.f32.mrf.mxu0
    %1263 = vmatprep.mubr.bf16.mxu0 0
    %1264 = vmatmul.mubr.bf16.gmra.mxu0 %v1210
    %v1265 = vpop.f32.mrf.mxu0
    %v1266 = vadd.f32 %v1189, %v1265
    %v1267 = vpop.f32.mrf.mxu0
    %v1268 = vpop.f32.mrf.mxu0
    %v1269 = vadd.f32 %v1189, %v1268
    %v1270 = vpop.f32.mrf.mxu0
    %1271 = vmatprep.mubr.bf16.mxu0 0
    %1272 = vmatmul.mubr.bf16.gmra.mxu0 %v1213
    %v1273 = vpop.f32.mrf.mxu0
    %v1274 = vadd.f32 %v1189, %v1273
    %v1275 = vpop.f32.mrf.mxu0
    %v1276 = vpop.f32.mrf.mxu0
    %v1277 = vadd.f32 %v1189, %v1276
    %v1278 = vpop.f32.mrf.mxu0
    %1279 = vdwg.mxu0
    %1280 = vst [vmem:[#allocation2] sm:$0xff] %v1250
    %1281 = vst [vmem:[#allocation2 + $0x8] sm:$0xff] %v1253
    %1282 = vst [vmem:[#allocation2 + $0x10] sm:$0xff] %v1258
    %1283 = vst [vmem:[#allocation2 + $0x18] sm:$0xff] %v1261
    %1284 = vst [vmem:[#allocation2 + $0x20] sm:$0xff] %v1266
    %1285 = vst [vmem:[#allocation2 + $0x28] sm:$0xff] %v1269
    %1286 = vst [vmem:[#allocation2 + $0x30] sm:$0xff] %v1274
    %1287 = vst [vmem:[#allocation2 + $0x38] sm:$0xff] %v1277
    // Predicated region
    $region38: #{tpu_custom_call.1} parent=1 // pred_check
      _
    $region39: #{tpu_custom_call.1} parent=1 // pred_check_branch
      %1289 = sbr.rel (0) target = $region41
    $region40: #{tpu_custom_call.1} parent=1 // pred_region
      %s1291 = ssub.s32 1024, 1024
      %1292 = vsyncadd [#allocation3], %s1291
      %s1293 = sshll.u32 [#allocation2], 4
      %s1294 = int_to_ptr.vmem [resolvable:$true] %s1293
      %1299 = dma.vmem_to_hbm [thread:$0]  %s1294, 1024, %s9, [#allocation3], 128, 128, 8
    $region41: #{tpu_custom_call.1} parent=1 // pred_fallthru
      _
    // Predicated region
    $region42: #{tpu_custom_call.1} parent=1 // pred_check
      _
    $region43: #{tpu_custom_call.1} parent=1 // pred_check_branch
      %1301 = sbr.rel (0) target = $region45
    $region44: #{tpu_custom_call.1} parent=1 // pred_region
      %1302 = dma.done [#allocation3], 1024
    $region45: #{tpu_custom_call.1} parent=1 // pred_fallthru
      _
    %1303 = vsyncpa [#allocation3], 1

</llo_original>
